<compile_context>
chip_gen: v7x
topology: tpu7x:2x2x1
jax: 0.10.0
libtpu: 0.0.40
codegen_flags: <defaults>
</compile_context>

<pallas_src>
import functools

import jax
import jax.numpy as jnp
from jax.experimental import pallas as pl
from jax.experimental.pallas import tpu as pltpu


def _global_model_kernel(gids_ref, x_ref, u_ref, w1u_ref, w1x_ref, b1_ref,
                         w2_ref, b2_ref, o_ref):
    """One grid step: Pt instances flattened into a single MXU M dimension.

    gids_ref: [1, 1, Pt*N] int32  block-local graph id per node (-1 = invalid)
    x_ref:    [Pt*N, F]    f32    node features (all Pt instances, stacked)
    u_ref:    [Pt*B, G]    f32    global features
    w1u_ref:  [G, H] bf16, w1x_ref: [F, H] bf16, b1_ref: [1, H] f32
    w2_ref:   [H, C] bf16, b2_ref: [1, C] f32
    o_ref:    [Pt*B, C]    f32
    """
    M = u_ref.shape[0]          # Pt*B flattened graph rows
    PN = x_ref.shape[0]         # Pt*N flattened nodes

    x = x_ref[...].astype(jnp.bfloat16)                               # [PN, F]
    u = u_ref[...].astype(jnp.bfloat16)                               # [M, G]
    gids = gids_ref[0]                                                # [1, PN]

    # Block-diagonal one-hot segment matrix: row m selects the nodes belonging
    # to flattened graph m.  Invalid/out-of-range ids were mapped to -1 in the
    # wrapper so they match no row (scatter_mean drop semantics).
    rows = jax.lax.broadcasted_iota(jnp.int32, (M, PN), 0)            # [M, PN]
    mask = rows == gids
    onehot = mask.astype(jnp.bfloat16)                                # exact 0/1

    counts = jnp.sum(mask.astype(jnp.float32), axis=1, keepdims=True) # [M, 1]
    inv = pl.reciprocal(jnp.maximum(counts, 1.0), approx=True)        # EUP
    # scatter_mean(x, batch) for every instance in the block: one bf16 MXU
    # matmul with f32 accumulation, normalized afterwards in f32.
    mean = jnp.dot(onehot, x, preferred_element_type=jnp.float32) * inv  # [M, F]

    # Linear(G+F -> H):  concat([u, mean]) @ W1  ==  u @ W1[:G] + mean @ W1[G:].
    h = (jnp.dot(u, w1u_ref[...], preferred_element_type=jnp.float32)
         + jnp.dot(mean.astype(jnp.bfloat16), w1x_ref[...],
                   preferred_element_type=jnp.float32)
         + b1_ref[...])                                                # [M, H]

    # ELU(alpha=1).  Dropout(0.3) is identity in eval mode.
    # TODO(synk): training-mode dropout is not implemented.
    h = jnp.where(h > 0.0, h, jnp.exp(jnp.minimum(h, 0.0)) - 1.0)

    out = (jnp.dot(h.astype(jnp.bfloat16), w2_ref[...],
                   preferred_element_type=jnp.float32) + b2_ref[...])  # [M, C]
    o_ref[...] = out.astype(o_ref.dtype)


@functools.partial(jax.jit, static_argnames=("instances_per_step",))
def global_model_forward_batched(xs, batches, us, params, *,
                                 instances_per_step=None):
    """P independent instances per pallas_call.

    xs: [P, N, F] f32, batches: [P, N] int32, us: [P, B, G] f32 -> [P, B, C].
    """
    w1u, w1x, b1, w2, b2 = params
    P, N, F = xs.shape
    _, B, G = us.shape
    H, C = w2.shape

    if instances_per_step is None:
        # Keep >=2 grid steps when possible so v7x's second TensorCore gets
        # work; each step still processes Pt instances to amortize the
        # ~0.35us/step overhead.  On v5e/v6e (1 TC) the extra step is noise.
        instances_per_step = P if (P % 2) else max(P // 2, 1)
    assert P % instances_per_step == 0, "P must be divisible by instances_per_step"
    Pt = instances_per_step
    num_steps = P // Pt
    M, PN = Pt * B, Pt * N

    # Flatten instances in the wrapper so the kernel sees lane/sublane-friendly
    # 2-D slabs and needs no in-kernel reshapes.
    xs_flat = xs.reshape(P * N, F)
    us_flat = us.reshape(P * B, G)

    # Block-local graph ids: node n of instance p maps to row (p % Pt)*B + batch.
    # Invalid ids (outside [0, B)) map to -1 so they are dropped (and cannot
    # bleed into a neighbouring instance of the same block).
    local = (jnp.arange(P, dtype=jnp.int32) % Pt)[:, None]            # [P, 1]
    b_ids = batches.astype(jnp.int32)
    valid = (b_ids >= 0) & (b_ids < B)
    gids = jnp.where(valid, b_ids + local * B, -1)                    # [P, N]
    gids = gids.reshape(num_steps, 1, PN)                             # [S, 1, PN]

    out_flat = pl.pallas_call(
        _global_model_kernel,
        out_shape=jax.ShapeDtypeStruct((P * B, C), jnp.float32),
        grid=(num_steps,),
        in_specs=[
            pl.BlockSpec((1, 1, PN), lambda s: (s, 0, 0)),  # block-local graph ids
            pl.BlockSpec((PN, F),    lambda s: (s, 0)),     # node features
            pl.BlockSpec((M, G),     lambda s: (s, 0)),     # global features
            pl.BlockSpec((G, H),     lambda s: (0, 0)),     # W1[:G]  (VMEM-resident)
            pl.BlockSpec((F, H),     lambda s: (0, 0)),     # W1[G:]  (VMEM-resident)
            pl.BlockSpec((1, H),     lambda s: (0, 0)),     # b1
            pl.BlockSpec((H, C),     lambda s: (0, 0)),     # W2      (VMEM-resident)
            pl.BlockSpec((1, C),     lambda s: (0, 0)),     # b2
        ],
        out_specs=pl.BlockSpec((M, C), lambda s: (s, 0)),
        compiler_params=pltpu.CompilerParams(
            dimension_semantics=("parallel",)),
    )(gids, xs_flat, us_flat, w1u, w1x, b1, w2, b2)

    return out_flat.reshape(P, B, C)


def global_model_forward(x, batch, u, params):
    """Single instance: x [N, F] f32, batch [N] int32, u [B, G] f32 -> [B, C].

    Routed through the batched kernel with P=1 (one code path)."""
    out = global_model_forward_batched(x[None], batch[None], u[None], params,
                                       instances_per_step=1)
    return out[0]


def init_params(key, num_node_features, num_global_features, hidden,
                out_channels):
    """PyTorch-Linear-style init (uniform +-1/sqrt(fan_in)); W1 split, bf16 weights."""
    k1, k2, k3, k4 = jax.random.split(key, 4)
    G, F = num_global_features, num_node_features
    fan_in1 = G + F
    lim1 = 1.0 / jnp.sqrt(fan_in1)
    lim2 = 1.0 / jnp.sqrt(hidden)
    w1 = jax.random.uniform(k1, (fan_in1, hidden), jnp.float32, -lim1, lim1)
    b1 = jax.random.uniform(k2, (1, hidden), jnp.float32, -lim1, lim1)
    w2 = jax.random.uniform(k3, (hidden, out_channels), jnp.float32, -lim2, lim2)
    b2 = jax.random.uniform(k4, (1, out_channels), jnp.float32, -lim2, lim2)
    w1u = w1[:G].astype(jnp.bfloat16)   # acts on u
    w1x = w1[G:].astype(jnp.bfloat16)   # acts on scatter_mean(x, batch)
    return (w1u, w1x, b1, w2.astype(jnp.bfloat16), b2)


def reference_forward(x, batch, u, params):
    """Pure-JAX reference mirroring the kernel math (bf16 MXU inputs, split W1)."""
    w1u, w1x, b1, w2, b2 = params
    B = u.shape[0]
    mask = jnp.arange(B)[:, None] == batch[None, :]
    counts = jnp.sum(mask.astype(jnp.float32), axis=1, keepdims=True)
    mean = jnp.dot(mask.astype(jnp.bfloat16), x.astype(jnp.bfloat16),
                   preferred_element_type=jnp.float32) / jnp.maximum(counts, 1.0)
    h = (jnp.dot(u.astype(jnp.bfloat16), w1u, preferred_element_type=jnp.float32)
         + jnp.dot(mean.astype(jnp.bfloat16), w1x, preferred_element_type=jnp.float32)
         + b1)
    h = jnp.where(h > 0.0, h, jnp.expm1(jnp.minimum(h, 0.0)))
    return jnp.dot(h.astype(jnp.bfloat16), w2,
                   preferred_element_type=jnp.float32) + b2


if __name__ == "__main__":
    num_node_features = 8
    num_global_features = 8
    out_channels = 8
    hidden = 256            # fixed by the module definition
    N = 16                  # nodes per instance
    B = 2                   # graphs per instance
    P = 8                   # independent instances per pallas_call (2 steps x 4)

    key = jax.random.PRNGKey(0)
    kx, ku, kp = jax.random.split(key, 3)

    xs = jax.random.normal(kx, (P, N, num_node_features), jnp.float32)
    us = jax.random.normal(ku, (P, B, num_global_features), jnp.float32)
    splits = jnp.array([4, 8, 10, 12, 2, 6, 14, 9], jnp.int32)
    batches = (jnp.arange(N)[None, :] >= splits[:, None]).astype(jnp.int32)  # [P, N]
    params = init_params(kp, num_node_features, num_global_features, hidden,
                         out_channels)

    out_single = global_model_forward(xs[0], batches[0], us[0], params)
    out_batched = global_model_forward_batched(xs, batches, us, params)
    out_single, out_batched = jax.block_until_ready((out_single, out_batched))

    ref = jnp.stack([reference_forward(xs[p], batches[p], us[p], params)
                     for p in range(P)])

    assert out_single.shape == (B, out_channels)
    assert out_batched.shape == (P, B, out_channels)
    assert jnp.allclose(out_single, ref[0], atol=2e-2, rtol=2e-2)
    assert jnp.allclose(out_batched, ref, atol=2e-2, rtol=2e-2)

    print("KERNEL_OK")
</pallas_src>

<mosaic_0001>
module attributes {stable_mosaic.version = 11 : i64} {
  func.func @_global_model_kernel(%arg0: i32, %arg1: memref<1x1x16xi32, #tpu.memory_space<vmem>>, %arg2: memref<16x8xf32, #tpu.memory_space<vmem>>, %arg3: memref<2x8xf32, #tpu.memory_space<vmem>>, %arg4: memref<8x256xbf16, #tpu.memory_space<vmem>>, %arg5: memref<8x256xbf16, #tpu.memory_space<vmem>>, %arg6: memref<1x256xf32, #tpu.memory_space<vmem>>, %arg7: memref<256x8xbf16, #tpu.memory_space<vmem>>, %arg8: memref<1x8xf32, #tpu.memory_space<vmem>>, %arg9: memref<2x8xf32, #tpu.memory_space<vmem>>) attributes {dimension_semantics = [#tpu.dimension_semantics<parallel>], iteration_bounds = array<i64: 1>, scalar_prefetch = 0 : i64, scratch_operands = 0 : i64, tpu.core_type = #tpu.core_type<tc>, window_params = [{transform_indices = @transform_0, window_bounds = array<i64: 1, 1, 16>}, {transform_indices = @transform_1, window_bounds = array<i64: 16, 8>}, {transform_indices = @transform_2, window_bounds = array<i64: 2, 8>}, {pipeline_mode = #tpu.pipeline_mode<synchronous>, transform_indices = @transform_3, window_bounds = array<i64: 8, 256>}, {pipeline_mode = #tpu.pipeline_mode<synchronous>, transform_indices = @transform_4, window_bounds = array<i64: 8, 256>}, {pipeline_mode = #tpu.pipeline_mode<synchronous>, transform_indices = @transform_5, window_bounds = array<i64: 1, 256>}, {pipeline_mode = #tpu.pipeline_mode<synchronous>, transform_indices = @transform_6, window_bounds = array<i64: 256, 8>}, {pipeline_mode = #tpu.pipeline_mode<synchronous>, transform_indices = @transform_7, window_bounds = array<i64: 1, 8>}, {transform_indices = @transform_8, window_bounds = array<i64: 2, 8>}]} {
    %c0 = arith.constant 0 : index
    %c0_0 = arith.constant 0 : index
    %0 = vector.load %arg2[%c0, %c0_0] : memref<16x8xf32, #tpu.memory_space<vmem>>, vector<16x8xf32>
    %1 = arith.truncf %0 : vector<16x8xf32> to vector<16x8xbf16>
    %c0_1 = arith.constant 0 : index
    %c0_2 = arith.constant 0 : index
    %2 = vector.load %arg3[%c0_1, %c0_2] : memref<2x8xf32, #tpu.memory_space<vmem>>, vector<2x8xf32>
    %3 = arith.truncf %2 : vector<2x8xf32> to vector<2x8xbf16>
    %c0_3 = arith.constant 0 : index
    %c0_4 = arith.constant 0 : index
    %c0_5 = arith.constant 0 : index
    %4 = vector.load %arg1[%c0_3, %c0_4, %c0_5] : memref<1x1x16xi32, #tpu.memory_space<vmem>>, vector<1x1x16xi32>
    %5 = vector.shape_cast %4 : vector<1x1x16xi32> to vector<1x16xi32>
    %6 = tpu.iota {dimensions = array<i32: 0>} : vector<2x16xi32>
    %7 = vector.broadcast %5 : vector<1x16xi32> to vector<2x16xi32>
    %8 = arith.cmpi eq, %6, %7 : vector<2x16xi32>
    %9 = arith.extui %8 : vector<2x16xi1> to vector<2x16xi32>
    %10 = arith.sitofp %9 : vector<2x16xi32> to vector<2x16xf32>
    %11 = arith.truncf %10 : vector<2x16xf32> to vector<2x16xbf16>
    %12 = arith.extui %8 : vector<2x16xi1> to vector<2x16xi32>
    %13 = arith.sitofp %12 : vector<2x16xi32> to vector<2x16xf32>
    %cst = arith.constant dense<0.000000e+00> : vector<2xf32>
    %14 = vector.multi_reduction <add>, %13, %cst [1] : vector<2x16xf32> to vector<2xf32>
    %15 = vector.shape_cast %14 : vector<2xf32> to vector<2x1xf32>
    %cst_6 = arith.constant 1.000000e+00 : f32
    %16 = vector.broadcast %cst_6 : f32 to vector<2x1xf32>
    %17 = arith.maximumf %15, %16 : vector<2x1xf32>
    %18 = tpu.reciprocal %17 {approx = true} : vector<2x1xf32> -> vector<2x1xf32>
    %cst_7 = arith.constant dense<0.000000e+00> : vector<2x8xf32>
    %19 = tpu.matmul %11, %1, %cst_7 {dimension_numbers = #tpu.dot_dimension_numbers<[1], [0], [0], [1], [0, 0, 1, 1], [], []>} : vector<2x16xbf16>, vector<16x8xbf16>, vector<2x8xf32> -> vector<2x8xf32>
    %20 = vector.broadcast %18 : vector<2x1xf32> to vector<2x8xf32>
    %21 = arith.mulf %19, %20 : vector<2x8xf32>
    %c0_8 = arith.constant 0 : index
    %c0_9 = arith.constant 0 : index
    %22 = vector.load %arg4[%c0_8, %c0_9] : memref<8x256xbf16, #tpu.memory_space<vmem>>, vector<8x256xbf16>
    %cst_10 = arith.constant dense<0.000000e+00> : vector<2x256xf32>
    %23 = tpu.matmul %3, %22, %cst_10 {dimension_numbers = #tpu.dot_dimension_numbers<[1], [0], [0], [1], [0, 0, 1, 1], [], []>} : vector<2x8xbf16>, vector<8x256xbf16>, vector<2x256xf32> -> vector<2x256xf32>
    %24 = arith.truncf %21 : vector<2x8xf32> to vector<2x8xbf16>
    %c0_11 = arith.constant 0 : index
    %c0_12 = arith.constant 0 : index
    %25 = vector.load %arg5[%c0_11, %c0_12] : memref<8x256xbf16, #tpu.memory_space<vmem>>, vector<8x256xbf16>
    %cst_13 = arith.constant dense<0.000000e+00> : vector<2x256xf32>
    %26 = tpu.matmul %24, %25, %cst_13 {dimension_numbers = #tpu.dot_dimension_numbers<[1], [0], [0], [1], [0, 0, 1, 1], [], []>} : vector<2x8xbf16>, vector<8x256xbf16>, vector<2x256xf32> -> vector<2x256xf32>
    %27 = arith.addf %23, %26 : vector<2x256xf32>
    %c0_14 = arith.constant 0 : index
    %c0_15 = arith.constant 0 : index
    %28 = vector.load %arg6[%c0_14, %c0_15] : memref<1x256xf32, #tpu.memory_space<vmem>>, vector<1x256xf32>
    %29 = vector.broadcast %28 : vector<1x256xf32> to vector<2x256xf32>
    %30 = arith.addf %27, %29 : vector<2x256xf32>
    %cst_16 = arith.constant 0.000000e+00 : f32
    %31 = vector.broadcast %cst_16 : f32 to vector<2x256xf32>
    %32 = arith.cmpf ogt, %30, %31 : vector<2x256xf32>
    %cst_17 = arith.constant 0.000000e+00 : f32
    %33 = vector.broadcast %cst_17 : f32 to vector<2x256xf32>
    %34 = arith.minimumf %30, %33 : vector<2x256xf32>
    %35 = math.exp %34 : vector<2x256xf32>
    %cst_18 = arith.constant 1.000000e+00 : f32
    %36 = vector.broadcast %cst_18 : f32 to vector<2x256xf32>
    %37 = arith.subf %35, %36 : vector<2x256xf32>
    %38 = arith.select %32, %30, %37 : vector<2x256xi1>, vector<2x256xf32>
    %39 = arith.truncf %38 : vector<2x256xf32> to vector<2x256xbf16>
    %c0_19 = arith.constant 0 : index
    %c0_20 = arith.constant 0 : index
    %40 = vector.load %arg7[%c0_19, %c0_20] : memref<256x8xbf16, #tpu.memory_space<vmem>>, vector<256x8xbf16>
    %cst_21 = arith.constant dense<0.000000e+00> : vector<2x8xf32>
    %41 = tpu.matmul %39, %40, %cst_21 {dimension_numbers = #tpu.dot_dimension_numbers<[1], [0], [0], [1], [0, 0, 1, 1], [], []>} : vector<2x256xbf16>, vector<256x8xbf16>, vector<2x8xf32> -> vector<2x8xf32>
    %c0_22 = arith.constant 0 : index
    %c0_23 = arith.constant 0 : index
    %42 = vector.load %arg8[%c0_22, %c0_23] : memref<1x8xf32, #tpu.memory_space<vmem>>, vector<1x8xf32>
    %43 = vector.broadcast %42 : vector<1x8xf32> to vector<2x8xf32>
    %44 = arith.addf %41, %43 : vector<2x8xf32>
    %c0_24 = arith.constant 0 : index
    %c0_25 = arith.constant 0 : index
    %45 = vector.load %arg9[%c0_24, %c0_25] : memref<2x8xf32, #tpu.memory_space<vmem>>, vector<2x8xf32>
    tpu.vector_store %arg9[%c0_24, %c0_25], %44 {strides = array<i32>} : memref<2x8xf32, #tpu.memory_space<vmem>>, vector<2x8xf32>,
    return
  }
  func.func @transform_0(%arg0: i32) -> (i32, i32, i32) {
    %c0_i32 = arith.constant 0 : i32
    %c0_i32_0 = arith.constant 0 : i32
    %c0_i32_1 = arith.constant 0 : i32
    return %arg0, %c0_i32, %c0_i32_0 : i32, i32, i32
  }
  func.func @transform_1(%arg0: i32) -> (i32, i32) {
    %c0_i32 = arith.constant 0 : i32
    %c0_i32_0 = arith.constant 0 : i32
    return %arg0, %c0_i32 : i32, i32
  }
  func.func @transform_2(%arg0: i32) -> (i32, i32) {
    %c0_i32 = arith.constant 0 : i32
    %c0_i32_0 = arith.constant 0 : i32
    return %arg0, %c0_i32 : i32, i32
  }
  func.func @transform_3(%arg0: i32) -> (i32, i32) {
    %c0_i32 = arith.constant 0 : i32
    %c0_i32_0 = arith.constant 0 : i32
    %c0_i32_1 = arith.constant 0 : i32
    return %c0_i32, %c0_i32_0 : i32, i32
  }
  func.func @transform_4(%arg0: i32) -> (i32, i32) {
    %c0_i32 = arith.constant 0 : i32
    %c0_i32_0 = arith.constant 0 : i32
    %c0_i32_1 = arith.constant 0 : i32
    return %c0_i32, %c0_i32_0 : i32, i32
  }
  func.func @transform_5(%arg0: i32) -> (i32, i32) {
    %c0_i32 = arith.constant 0 : i32
    %c0_i32_0 = arith.constant 0 : i32
    %c0_i32_1 = arith.constant 0 : i32
    return %c0_i32, %c0_i32_0 : i32, i32
  }
  func.func @transform_6(%arg0: i32) -> (i32, i32) {
    %c0_i32 = arith.constant 0 : i32
    %c0_i32_0 = arith.constant 0 : i32
    %c0_i32_1 = arith.constant 0 : i32
    return %c0_i32, %c0_i32_0 : i32, i32
  }
  func.func @transform_7(%arg0: i32) -> (i32, i32) {
    %c0_i32 = arith.constant 0 : i32
    %c0_i32_0 = arith.constant 0 : i32
    %c0_i32_1 = arith.constant 0 : i32
    return %c0_i32, %c0_i32_0 : i32, i32
  }
  func.func @transform_8(%arg0: i32) -> (i32, i32) {
    %c0_i32 = arith.constant 0 : i32
    %c0_i32_0 = arith.constant 0 : i32
    return %arg0, %c0_i32 : i32, i32
  }
}

</mosaic_0001>

<llo_original>
// kernel: global_model_forward_batched.1
$region0: #{global_model_forward_batched.1}
  #allocation0 [shape = 'u32[]', space=smem, size = 0x4, offset = 0x4, fixed_abs, tag = 'smem constant byte address 0x4 - core index']
  #allocation1 [shape = 'u32[144,128]{1,0:T(1,128)}', space=vmem, size = 0x12000, scoped, tag = 'internal scratch']
  %s0 = inlined_call_operand.vmem [shape: s32[1,1,16], index: 0, kind: input, shape index: {}]
  %s1 = inlined_call_operand.vmem [shape: f32[16,8], index: 1, kind: input, shape index: {}]
  %s2 = inlined_call_operand.vmem [shape: f32[2,8], index: 2, kind: input, shape index: {}]
  %s3 = inlined_call_operand.vmem [shape: bf16[8,256], index: 3, kind: input, shape index: {}]
  %s4 = inlined_call_operand.vmem [shape: bf16[8,256], index: 4, kind: input, shape index: {}]
  %s5 = inlined_call_operand.vmem [shape: f32[1,256], index: 5, kind: input, shape index: {}]
  %s6 = inlined_call_operand.vmem [shape: bf16[256,8], index: 6, kind: input, shape index: {}]
  %s7 = inlined_call_operand.vmem [shape: f32[1,8], index: 7, kind: input, shape index: {}]
  %s8 = inlined_call_operand.hbm [shape: f32[2,8], index: 8, kind: output, shape index: {}]
  %s9 = sld [smem:[#allocation0]]
  $region42: #{global_model_forward_batched.1} parent=0
    _
  %s11 = ssub.s32 1, %s9
  %s12 = scalar_select 0, %s11, %s9
  $region1: #{global_model_forward_batched.1} parent=0
    #allocation2 [shape = 'u8[1024]{0}', space=vmem, size = 0x400, scoped, tag = 'output window, operand 0, single buffered']
    #allocation3 [shape = 's32[1]{0}', space=sflag, size = 0x4, scoped, tag = 'scoped memory for global_model_forward_batched.1']
    %13 = vsyncpa [#allocation3], 0
    // Predicated region
    $region2: #{global_model_forward_batched.1} parent=1 // pred_check
      _
    $region3: #{global_model_forward_batched.1} parent=1 // pred_check_branch
      %15 = sbr.rel (0) target = $region5
    $region4: #{global_model_forward_batched.1} parent=1 // pred_region
      _
    $region5: #{global_model_forward_batched.1} parent=1 // pred_fallthru
      _
    // Predicated region
    $region6: #{global_model_forward_batched.1} parent=1 // pred_check
      _
    $region7: #{global_model_forward_batched.1} parent=1 // pred_check_branch
      %17 = sbr.rel (0) target = $region9
    $region8: #{global_model_forward_batched.1} parent=1 // pred_region
      _
    $region9: #{global_model_forward_batched.1} parent=1 // pred_fallthru
      _
    // Predicated region
    $region10: #{global_model_forward_batched.1} parent=1 // pred_check
      _
    $region11: #{global_model_forward_batched.1} parent=1 // pred_check_branch
      %19 = sbr.rel (0) target = $region13
    $region12: #{global_model_forward_batched.1} parent=1 // pred_region
      _
    $region13: #{global_model_forward_batched.1} parent=1 // pred_fallthru
      _
    // Predicated region
    $region14: #{global_model_forward_batched.1} parent=1 // pred_check
      _
    $region15: #{global_model_forward_batched.1} parent=1 // pred_check_branch
      %21 = sbr.rel (0) target = $region17
    $region16: #{global_model_forward_batched.1} parent=1 // pred_region
      _
    $region17: #{global_model_forward_batched.1} parent=1 // pred_fallthru
      _
    // Predicated region
    $region18: #{global_model_forward_batched.1} parent=1 // pred_check
      _
    $region19: #{global_model_forward_batched.1} parent=1 // pred_check_branch
      %23 = sbr.rel (0) target = $region21
    $region20: #{global_model_forward_batched.1} parent=1 // pred_region
      _
    $region21: #{global_model_forward_batched.1} parent=1 // pred_fallthru
      _
    // Predicated region
    $region22: #{global_model_forward_batched.1} parent=1 // pred_check
      _
    $region23: #{global_model_forward_batched.1} parent=1 // pred_check_branch
      %25 = sbr.rel (0) target = $region25
    $region24: #{global_model_forward_batched.1} parent=1 // pred_region
      _
    $region25: #{global_model_forward_batched.1} parent=1 // pred_fallthru
      _
    // Predicated region
    $region26: #{global_model_forward_batched.1} parent=1 // pred_check
      _
    $region27: #{global_model_forward_batched.1} parent=1 // pred_check_branch
      %27 = sbr.rel (0) target = $region29
    $region28: #{global_model_forward_batched.1} parent=1 // pred_region
      _
    $region29: #{global_model_forward_batched.1} parent=1 // pred_fallthru
      _
    // Predicated region
    $region30: #{global_model_forward_batched.1} parent=1 // pred_check
      _
    $region31: #{global_model_forward_batched.1} parent=1 // pred_check_branch
      %29 = sbr.rel (0) target = $region33
    $region32: #{global_model_forward_batched.1} parent=1 // pred_region
      _
    $region33: #{global_model_forward_batched.1} parent=1 // pred_fallthru
      _
    %v31 = vld [vmem:[%s1] sm:$0xff]
    %v32 = vld [vmem:[%s1 + $0x8] sm:$0xff]
    %v33 = vpack.c.bf16 %v32, %v31
    %v34 = vld [vmem:[%s2] sm:$0x3]
    %v35 = vpack.c.bf16 %v34, %v34
    %v36 = vld [vmem:[%s0] sm:$0x1]
    %v37 = vlaneseq
    %v38 = vshrl.u32 %v37, 7
    %v39 = vlaneseq
    %v40 = vshrl.u32 %v39, 7
    %v41 = vsub.s32 0, %v40
    %v42 = vrot.slane %v36, %v41
    %vm43 = vcmp.eq.s32.totalorder %v38, %v42
    %v44 = vsel %vm43, 1, 0
    %v45 = vcvt.s32.f32 %v44
    %v46 = vpack.c.bf16 %v45, %v45
    %vm47 = vcmask 123904
    %v48 = vsel %vm47, %v45, 0.0
    %49 = vadd.xlane.f32.xlu0 %v48
    %v50 = vpop.xlane.xlu0 %49
    %v51 = vmax.f32 %v50, 1.0
    %v52 = vrcp.pop %v51
    %vm53 = vcmask 130048
    %v55 = vsel %vm53, %v46, 0
    %57 = vmatprep.subr.bf16.mxu0 0
    %58 = vmatpush1.bf16.msra.mxu0 %v33
    %59 = vmatprep.subr.bf16.mxu0 0
    %60 = vmatpush1.bf16.msra.mxu0 0
    %61 = vmatprep.subr.bf16.mxu0 0
    %62 = vmatpush1.bf16.msra.mxu0 0
    %63 = vmatprep.subr.bf16.mxu0 0
    %64 = vmatpush1.bf16.msra.mxu0 0
    %65 = vmatprep.subr.bf16.mxu0 0
    %66 = vmatpush1.bf16.msra.mxu0 0
    %67 = vmatprep.subr.bf16.mxu0 0
    %68 = vmatpush1.bf16.msra.mxu0 0
    %69 = vmatprep.subr.bf16.mxu0 0
    %70 = vmatpush1.bf16.msra.mxu0 0
    %71 = vmatprep.subr.bf16.mxu0 0
    %72 = vmatpush1.bf16.msra.mxu0 0
    %73 = vmatprep.subr.bf16.mxu0 0
    %74 = vmatpush1.bf16.msra.mxu0 0
    %75 = vmatprep.subr.bf16.mxu0 0
    %76 = vmatpush1.bf16.msra.mxu0 0
    %77 = vmatprep.subr.bf16.mxu0 0
    %78 = vmatpush1.bf16.msra.mxu0 0
    %79 = vmatprep.subr.bf16.mxu0 0
    %80 = vmatpush1.bf16.msra.mxu0 0
    %81 = vmatprep.subr.bf16.mxu0 0
    %82 = vmatpush1.bf16.msra.mxu0 0
    %83 = vmatprep.subr.bf16.mxu0 0
    %84 = vmatpush1.bf16.msra.mxu0 0
    %85 = vmatprep.subr.bf16.mxu0 0
    %86 = vmatpush1.bf16.msra.mxu0 0
    %87 = vmatprep.subr.bf16.mxu0 0
    %88 = vmatpush1.bf16.msra.mxu0 0
    %89 = vmatprep.mubr.bf16.mxu0 0
    %90 = vmatmul.mubr.bf16.gmra.mrb[0].mxu0 %v55
    %v91 = vpop.f32.mrb[0].mxu0
    %v92 = vadd.f32 0.0, %v91
    %v93 = vpop.f32.mrb[0].mxu0
    %v94 = vpop.f32.mrb[0].mxu0
    %v95 = vpop.f32.mrb[0].mxu0
    %96 = vdwg.mxu0
    %v97 = vmul.f32 %v92, %v52
    %v98 = vld [vmem:[%s3] sm:$0xff]
    %v99 = vpack.c.bf16 %v97, %v97
    %v100 = vld [vmem:[%s4] sm:$0xff]
    %v102 = vunpack.c.l.b16 %v100
    %v103 = vunpack.c.h.b16 %v100
    %v104 = vpack.c.b16 %v102, %v102
    %v105 = vpack.c.b16 %v103, %v103
    %vm106 = vcmask 64512
    %v108 = vsel %vm106, %v99, 0
    %vm110 = vcmask 1043456
    %v112 = vsel %vm110, %v104, 0
    %v115 = vsel %vm110, %v105, 0
    %117 = vmatprep.subr.bf16.mxu0 %v115
    %118 = vmatpush1.bf16.msra.mxu0 %v112
    %119 = vmatprep.subr.bf16.mxu0 0
    %120 = vmatpush1.bf16.msra.mxu0 0
    %121 = vmatprep.subr.bf16.mxu0 0
    %122 = vmatpush1.bf16.msra.mxu0 0
    %123 = vmatprep.subr.bf16.mxu0 0
    %124 = vmatpush1.bf16.msra.mxu0 0
    %125 = vmatprep.subr.bf16.mxu0 0
    %126 = vmatpush1.bf16.msra.mxu0 0
    %127 = vmatprep.subr.bf16.mxu0 0
    %128 = vmatpush1.bf16.msra.mxu0 0
    %129 = vmatprep.subr.bf16.mxu0 0
    %130 = vmatpush1.bf16.msra.mxu0 0
    %131 = vmatprep.subr.bf16.mxu0 0
    %132 = vmatpush1.bf16.msra.mxu0 0
    %133 = vmatprep.subr.bf16.mxu0 0
    %134 = vmatpush1.bf16.msra.mxu0 0
    %135 = vmatprep.subr.bf16.mxu0 0
    %136 = vmatpush1.bf16.msra.mxu0 0
    %137 = vmatprep.subr.bf16.mxu0 0
    %138 = vmatpush1.bf16.msra.mxu0 0
    %139 = vmatprep.subr.bf16.mxu0 0
    %140 = vmatpush1.bf16.msra.mxu0 0
    %141 = vmatprep.subr.bf16.mxu0 0
    %142 = vmatpush1.bf16.msra.mxu0 0
    %143 = vmatprep.subr.bf16.mxu0 0
    %144 = vmatpush1.bf16.msra.mxu0 0
    %145 = vmatprep.subr.bf16.mxu0 0
    %146 = vmatpush1.bf16.msra.mxu0 0
    %147 = vmatprep.subr.bf16.mxu0 0
    %148 = vmatpush1.bf16.msra.mxu0 0
    %149 = vmatprep.mubr.bf16.mxu0 0
    %150 = vmatmul.mubr.bf16.gmra.mrb[0].mxu0 %v108
    %v151 = vpop.f32.mrb[0].mxu0
    %v152 = vadd.f32 0.0, %v151
    %v153 = vpop.f32.mrb[0].mxu0
    %v154 = vadd.f32 0.0, %v153
    %v155 = vpop.f32.mrb[0].mxu0
    %v156 = vpop.f32.mrb[0].mxu0
    %157 = vdwg.mxu0
    %v159 = vunpack.c.l.b16 %v98
    %v160 = vunpack.c.h.b16 %v98
    %v161 = vpack.c.b16 %v159, %v159
    %v162 = vpack.c.b16 %v160, %v160
    %v164 = vsel %vm106, %v35, 0
    %v167 = vsel %vm110, %v161, 0
    %v170 = vsel %vm110, %v162, 0
    %172 = vmatprep.subr.bf16.mxu0 %v170
    %173 = vmatpush1.bf16.msra.mxu0 %v167
    %174 = vmatprep.subr.bf16.mxu0 0
    %175 = vmatpush1.bf16.msra.mxu0 0
    %176 = vmatprep.subr.bf16.mxu0 0
    %177 = vmatpush1.bf16.msra.mxu0 0
    %178 = vmatprep.subr.bf16.mxu0 0
    %179 = vmatpush1.bf16.msra.mxu0 0
    %180 = vmatprep.subr.bf16.mxu0 0
    %181 = vmatpush1.bf16.msra.mxu0 0
    %182 = vmatprep.subr.bf16.mxu0 0
    %183 = vmatpush1.bf16.msra.mxu0 0
    %184 = vmatprep.subr.bf16.mxu0 0
    %185 = vmatpush1.bf16.msra.mxu0 0
    %186 = vmatprep.subr.bf16.mxu0 0
    %187 = vmatpush1.bf16.msra.mxu0 0
    %188 = vmatprep.subr.bf16.mxu0 0
    %189 = vmatpush1.bf16.msra.mxu0 0
    %190 = vmatprep.subr.bf16.mxu0 0
    %191 = vmatpush1.bf16.msra.mxu0 0
    %192 = vmatprep.subr.bf16.mxu0 0
    %193 = vmatpush1.bf16.msra.mxu0 0
    %194 = vmatprep.subr.bf16.mxu0 0
    %195 = vmatpush1.bf16.msra.mxu0 0
    %196 = vmatprep.subr.bf16.mxu0 0
    %197 = vmatpush1.bf16.msra.mxu0 0
    %198 = vmatprep.subr.bf16.mxu0 0
    %199 = vmatpush1.bf16.msra.mxu0 0
    %200 = vmatprep.subr.bf16.mxu0 0
    %201 = vmatpush1.bf16.msra.mxu0 0
    %202 = vmatprep.subr.bf16.mxu0 0
    %203 = vmatpush1.bf16.msra.mxu0 0
    %204 = vmatprep.mubr.bf16.mxu0 0
    %205 = vmatmul.mubr.bf16.gmra.mrb[0].mxu0 %v164
    %v206 = vpop.f32.mrb[0].mxu0
    %v207 = vadd.f32 %v152, %v206
    %v208 = vpop.f32.mrb[0].mxu0
    %v209 = vadd.f32 %v154, %v208
    %v210 = vpop.f32.mrb[0].mxu0
    %v211 = vpop.f32.mrb[0].mxu0
    %212 = vdwg.mxu0
    %v213 = vld [vmem:[%s5] sm:$0x3]
    %v215 = vlaneseq
    %v216 = vshrl.u32 %v215, 7
    %v217 = vsub.s32 0, %v216
    %v218 = vrot.slane %v213, %v217
    %v219 = vlaneseq
    %v220 = vshrl.u32 %v219, 7
    %v221 = vsub.s32 1, %v220
    %v222 = vrot.slane %v213, %v221
    %v225 = vadd.f32 %v207, %v218
    %v226 = vadd.f32 %v209, %v222
    %vm227 = vcmp.gt.f32.partialorder %v225, 0.0
    %vm228 = vcmp.gt.f32.partialorder %v226, 0.0
    %v229 = vmin.f32 %v225, 0.0
    %v230 = vmin.f32 %v226, 0.0
    %v231 = vmul.f32 %v229, 1.442695
    %v232 = vpow.pop %v231
    %v233 = vmul.f32 %v230, 1.442695
    %v234 = vpow.pop %v233
    %v235 = vsub.f32 %v232, 1.0
    %v236 = vsub.f32 %v234, 1.0
    %v237 = vsel %vm227, %v225, %v235
    %v238 = vsel %vm228, %v226, %v236
    %v239 = vpack.c.bf16 %v237, %v237
    %v240 = vpack.c.bf16 %v238, %v238
    %v241 = vld [vmem:[%s6] sm:$0xf]
    %v242 = vld [vmem:[%s6 + $0x4] sm:$0xf]
    %v243 = vld [vmem:[%s6 + $0x8] sm:$0xf]
    %v244 = vld [vmem:[%s6 + $0xc] sm:$0xf]
    %v245 = vld [vmem:[%s6 + $0x10] sm:$0xf]
    %v246 = vld [vmem:[%s6 + $0x14] sm:$0xf]
    %v247 = vld [vmem:[%s6 + $0x18] sm:$0xf]
    %v248 = vld [vmem:[%s6 + $0x1c] sm:$0xf]
    %v249 = vld [vmem:[%s6 + $0x20] sm:$0xf]
    %v250 = vld [vmem:[%s6 + $0x24] sm:$0xf]
    %v251 = vld [vmem:[%s6 + $0x28] sm:$0xf]
    %v252 = vld [vmem:[%s6 + $0x2c] sm:$0xf]
    %v253 = vld [vmem:[%s6 + $0x30] sm:$0xf]
    %v254 = vld [vmem:[%s6 + $0x34] sm:$0xf]
    %v255 = vld [vmem:[%s6 + $0x38] sm:$0xf]
    %v256 = vld [vmem:[%s6 + $0x3c] sm:$0xf]
    %v257 = vld [vmem:[%s6 + $0x40] sm:$0xf]
    %v258 = vld [vmem:[%s6 + $0x44] sm:$0xf]
    %v259 = vld [vmem:[%s6 + $0x48] sm:$0xf]
    %v260 = vld [vmem:[%s6 + $0x4c] sm:$0xf]
    %v261 = vld [vmem:[%s6 + $0x50] sm:$0xf]
    %v262 = vld [vmem:[%s6 + $0x54] sm:$0xf]
    %v263 = vld [vmem:[%s6 + $0x58] sm:$0xf]
    %v264 = vld [vmem:[%s6 + $0x5c] sm:$0xf]
    %v265 = vld [vmem:[%s6 + $0x60] sm:$0xf]
    %v266 = vld [vmem:[%s6 + $0x64] sm:$0xf]
    %v267 = vld [vmem:[%s6 + $0x68] sm:$0xf]
    %v268 = vld [vmem:[%s6 + $0x6c] sm:$0xf]
    %v269 = vld [vmem:[%s6 + $0x70] sm:$0xf]
    %v270 = vld [vmem:[%s6 + $0x74] sm:$0xf]
    %v271 = vld [vmem:[%s6 + $0x78] sm:$0xf]
    %v272 = vld [vmem:[%s6 + $0x7c] sm:$0xf]
    %v273 = vld [vmem:[%s7] sm:$0x1]
    %v275 = vlaneseq
    %v276 = vshrl.u32 %v275, 7
    %v277 = vsub.s32 0, %v276
    %v278 = vrot.slane %v273, %v277
    %v312 = vunpack.c.l.b16 %v241
    %v313 = vunpack.c.l.b16 %v242
    %v314 = vunpack.c.l.b16 %v243
    %v315 = vunpack.c.l.b16 %v244
    %v316 = vunpack.c.l.b16 %v245
    %v317 = vunpack.c.l.b16 %v246
    %v318 = vunpack.c.l.b16 %v247
    %v319 = vunpack.c.l.b16 %v248
    %v320 = vunpack.c.l.b16 %v249
    %v321 = vunpack.c.l.b16 %v250
    %v322 = vunpack.c.l.b16 %v251
    %v323 = vunpack.c.l.b16 %v252
    %v324 = vunpack.c.l.b16 %v253
    %v325 = vunpack.c.l.b16 %v254
    %v326 = vunpack.c.l.b16 %v255
    %v327 = vunpack.c.l.b16 %v256
    %v328 = vunpack.c.l.b16 %v257
    %v329 = vunpack.c.l.b16 %v258
    %v330 = vunpack.c.l.b16 %v259
    %v331 = vunpack.c.l.b16 %v260
    %v332 = vunpack.c.l.b16 %v261
    %v333 = vunpack.c.l.b16 %v262
    %v334 = vunpack.c.l.b16 %v263
    %v335 = vunpack.c.l.b16 %v264
    %v336 = vunpack.c.l.b16 %v265
    %v337 = vunpack.c.l.b16 %v266
    %v338 = vunpack.c.l.b16 %v267
    %v339 = vunpack.c.l.b16 %v268
    %v340 = vunpack.c.l.b16 %v269
    %v341 = vunpack.c.l.b16 %v270
    %v342 = vunpack.c.l.b16 %v271
    %v343 = vunpack.c.l.b16 %v272
    %v344 = vpack.c.b16 %v313, %v312
    %v345 = vpack.c.b16 %v315, %v314
    %v346 = vpack.c.b16 %v317, %v316
    %v347 = vpack.c.b16 %v319, %v318
    %v348 = vpack.c.b16 %v321, %v320
    %v349 = vpack.c.b16 %v323, %v322
    %v350 = vpack.c.b16 %v325, %v324
    %v351 = vpack.c.b16 %v327, %v326
    %v352 = vpack.c.b16 %v329, %v328
    %v353 = vpack.c.b16 %v331, %v330
    %v354 = vpack.c.b16 %v333, %v332
    %v355 = vpack.c.b16 %v335, %v334
    %v356 = vpack.c.b16 %v337, %v336
    %v357 = vpack.c.b16 %v339, %v338
    %v358 = vpack.c.b16 %v341, %v340
    %v359 = vpack.c.b16 %v343, %v342
    %376 = vmatprep.subr.bf16.mxu0 0
    %377 = vmatpush1.bf16.msra.mxu0 %v344
    %378 = vmatprep.subr.bf16.mxu0 0
    %379 = vmatpush1.bf16.msra.mxu0 %v345
    %380 = vmatprep.subr.bf16.mxu0 0
    %381 = vmatpush1.bf16.msra.mxu0 %v346
    %382 = vmatprep.subr.bf16.mxu0 0
    %383 = vmatpush1.bf16.msra.mxu0 %v347
    %384 = vmatprep.subr.bf16.mxu0 0
    %385 = vmatpush1.bf16.msra.mxu0 %v348
    %386 = vmatprep.subr.bf16.mxu0 0
    %387 = vmatpush1.bf16.msra.mxu0 %v349
    %388 = vmatprep.subr.bf16.mxu0 0
    %389 = vmatpush1.bf16.msra.mxu0 %v350
    %390 = vmatprep.subr.bf16.mxu0 0
    %391 = vmatpush1.bf16.msra.mxu0 %v351
    %392 = vmatprep.subr.bf16.mxu0 0
    %393 = vmatpush1.bf16.msra.mxu0 %v352
    %394 = vmatprep.subr.bf16.mxu0 0
    %395 = vmatpush1.bf16.msra.mxu0 %v353
    %396 = vmatprep.subr.bf16.mxu0 0
    %397 = vmatpush1.bf16.msra.mxu0 %v354
    %398 = vmatprep.subr.bf16.mxu0 0
    %399 = vmatpush1.bf16.msra.mxu0 %v355
    %400 = vmatprep.subr.bf16.mxu0 0
    %401 = vmatpush1.bf16.msra.mxu0 %v356
    %402 = vmatprep.subr.bf16.mxu0 0
    %403 = vmatpush1.bf16.msra.mxu0 %v357
    %404 = vmatprep.subr.bf16.mxu0 0
    %405 = vmatpush1.bf16.msra.mxu0 %v358
    %406 = vmatprep.subr.bf16.mxu0 0
    %407 = vmatpush1.bf16.msra.mxu0 %v359
    %408 = vmatprep.mubr.bf16.mxu0 %v240
    %409 = vmatmul.mubr.bf16.gmra.mrb[0].mxu0 %v239
    %v410 = vpop.f32.mrb[0].mxu0
    %v411 = vadd.f32 %v278, %v410
    %v412 = vpop.f32.mrb[0].mxu0
    %v413 = vpop.f32.mrb[0].mxu0
    %v414 = vpop.f32.mrb[0].mxu0
    %415 = vdwg.mxu0
    %vm416 = vcmask 58368
    %417 = vst.msk [vmem:[#allocation2] sm:$0x3] %vm416, %v411
    // Predicated region
    $region34: #{global_model_forward_batched.1} parent=1 // pred_check
      _
    $region35: #{global_model_forward_batched.1} parent=1 // pred_check_branch
      %419 = sbr.rel (0) target = $region37
    $region36: #{global_model_forward_batched.1} parent=1 // pred_region
      %s421 = ssub.s32 32, 32
      %422 = vsyncadd [#allocation3], %s421
      %s424 = sshll.u32 [#allocation2], 4
      %s425 = int_to_ptr.vmem [resolvable:$true] %s424
      %427 = dma.vmem_to_hbm [thread:$0]  %s425, 32, %s8, [#allocation3]
    $region37: #{global_model_forward_batched.1} parent=1 // pred_fallthru
      _
    // Predicated region
    $region38: #{global_model_forward_batched.1} parent=1 // pred_check
      _
    $region39: #{global_model_forward_batched.1} parent=1 // pred_check_branch
      %429 = sbr.rel (0) target = $region41
    $region40: #{global_model_forward_batched.1} parent=1 // pred_region
      %430 = dma.done [#allocation3], 32
    $region41: #{global_model_forward_batched.1} parent=1 // pred_fallthru
      _
    %431 = vsyncpa [#allocation3], 1

</llo_original>
